<compile_context>
chip_gen: v6e
topology: v6e:2x2x1
jax: 0.10.0
libtpu: 0.0.40
codegen_flags: <defaults>
</compile_context>

<pallas_src>
import functools

import jax
import jax.numpy as jnp
from jax import lax
from jax.experimental import pallas as pl
from jax.experimental.pallas import tpu as pltpu


_DEFAULT_BLOCK_BUDGET_BYTES = 4 << 20    # per input block per grid step
_MIN_GRID_STEPS = 8                      # target step count for overlap/megacore
_MIN_SPLIT_BLOCK_BYTES = 512 << 10       # never shrink blocks below this just
                                         # to manufacture extra grid steps


def _cdiv(a, b):
    return -(-a // b)


def _pick_lane_block(l, cap):
    """Largest multiple of 128 <= cap dividing l, else the 128-aligned cap
    (the kernel then lane-masks the ragged tail block)."""
    cap = max(128, (min(l, cap) // 128) * 128)
    k = cap // 128
    while k >= 1:
        if l % (k * 128) == 0:
            return k * 128
        k -= 1
    return cap


def _pick_row_block(nc, cap):
    """Largest multiple of 8 <= cap dividing nc, else the 8-aligned cap
    (the kernel then row-masks the ragged tail block)."""
    cap = max(8, (cap // 8) * 8)
    r = cap
    while r >= 8:
        if nc % r == 0:
            return r
        r -= 8
    return cap


def _heatmap_weighted_loss_kernel(w_ref, gt_ref, pred_ref, out_ref, *,
                                  nc, l, r, lb, mask_rows, mask_lanes):
    # w_ref   : VMEM (R, 1)   per-(n,c)-row class weights (zero-padded rows)
    # gt_ref  : VMEM (R, LB)
    # pred_ref: VMEM (R, LB)
    # out_ref : VMEM (1, 1, 1) f32 partial, accumulated across the j axis
    j = pl.program_id(1)
    d = gt_ref[...].astype(jnp.float32) - pred_ref[...].astype(jnp.float32)

    # Masks are only emitted when the block shape does not divide the array
    # (static trace-time decision); ragged-tail blocks contain undefined data
    # which is zeroed here before it can touch the reduction.
    if mask_rows or mask_lanes:
        mask = None
        if mask_rows:
            rows = (lax.broadcasted_iota(jnp.int32, (r, lb), 0)
                    + pl.program_id(0) * r)
            mask = rows < nc
        if mask_lanes:
            lanes = lax.broadcasted_iota(jnp.int32, (r, lb), 1) + j * lb
            lmask = lanes < l
            mask = lmask if mask is None else jnp.logical_and(mask, lmask)
        d = jnp.where(mask, d, 0.0)

    # Lane (XLU) reduction first; the per-row class weight is applied to the
    # R reduced values instead of the full R*LB block (saves a full-width
    # VPU multiply per element).
    row_sq = jnp.sum(d * d, axis=-1, keepdims=True)      # (R, 1)
    block_sum = jnp.sum(w_ref[...] * row_sq)             # scalar f32

    @pl.when(j == 0)
    def _init():
        out_ref[...] = jnp.zeros_like(out_ref)

    out_ref[...] += block_sum                            # resident across j


def heatmap_weighted_loss(heatmaps_gt, heatmaps_pred, weights,
                          block_budget_bytes=_DEFAULT_BLOCK_BUDGET_BYTES):
    """Weighted-MSE heatmap loss.

    heatmaps_*: (N, C, H, W); weights: (1, C) as stored by the module.
    Pass bf16 heatmaps directly (do NOT astype beforehand): the kernel is
    HBM-bandwidth bound and upcasts to f32 internally.
    """
    assert heatmaps_gt.shape == heatmaps_pred.shape
    N, C, H, W = heatmaps_gt.shape
    w_flat = jnp.reshape(weights, (-1,)).astype(jnp.float32)
    assert w_flat.shape[0] == C, "class_weights must match channel count"

    block_budget_bytes = max(int(block_budget_bytes), 4096)
    NC, L = N * C, H * W
    total = NC * L
    itemsize = max(jnp.dtype(heatmaps_gt.dtype).itemsize,
                   jnp.dtype(heatmaps_pred.dtype).itemsize)

    # ---- lane (last-dim) block: full row if 8 rows fit the budget, else a
    #      128-aligned chunk (prefer one dividing L so no lane mask). ----
    if L <= 128 or 8 * L * itemsize <= block_budget_bytes:
        LB = L
    else:
        LB = _pick_lane_block(L, block_budget_bytes // (8 * itemsize))
    G_l = _cdiv(L, LB)

    # ---- row (sublane) block: multiple of 8, capped by both the byte budget
    #      (incl. the lane-padded weight column) and a grid-step target so R
    #      never swallows the whole N*C axis; prefer a divisor of N*C. ----
    if NC <= 8:
        R = NC                                   # block dim == full dim: legal
    else:
        rows_budget = (2 * block_budget_bytes) // (2 * LB * itemsize + 512)
        grid_cap = max(8, NC // _MIN_GRID_STEPS)
        R = _pick_row_block(NC, min(rows_budget, grid_cap))
    G_r = _cdiv(NC, R)

    # ---- if the grid is still too short (small N*C, mid-size H*W), split the
    #      lane axis further — but keep input blocks >= ~512 KiB. ----
    if G_r * G_l < _MIN_GRID_STEPS and L > 128:
        want_gl = _cdiv(_MIN_GRID_STEPS, G_r)
        floor_lb = ((_MIN_SPLIT_BLOCK_BYTES // max(R * itemsize, 1)) // 128) * 128
        cap2 = max(128, floor_lb, ((L // want_gl) // 128) * 128)
        if cap2 < LB:
            LB = _pick_lane_block(L, cap2)
            G_l = _cdiv(L, LB)

    mask_rows = (NC % R) != 0
    mask_lanes = (L % LB) != 0
    NC_pad = G_r * R

    # Free (contiguous) reshapes: fused spatial axis on lanes.
    gt2 = jnp.reshape(heatmaps_gt, (NC, L))
    pred2 = jnp.reshape(heatmaps_pred, (NC, L))

    # Per-row weights (row n*C + c gets weights[c]); zero-pad the ragged tail
    # rows (tiny array, cheap).
    w_rows = jnp.tile(w_flat, N)                              # (NC,)
    if NC_pad != NC:
        w_rows = jnp.concatenate(
            [w_rows, jnp.zeros((NC_pad - NC,), jnp.float32)])
    w2 = jnp.reshape(w_rows, (NC_pad, 1))

    kernel = functools.partial(
        _heatmap_weighted_loss_kernel,
        nc=NC, l=L, r=R, lb=LB, mask_rows=mask_rows, mask_lanes=mask_lanes)

    # Explicit VMEM accounting: 2 pipeline buffers x (2 input blocks +
    # lane-padded (R,1)->(R,128) f32 weight column + padded out block),
    # plus headroom for compiler-internal scratch.
    block_in_bytes = R * LB * itemsize
    vmem_needed = 2 * (2 * block_in_bytes + R * 128 * 4 + 8 * 128 * 4)
    vmem_limit = int(min(max(vmem_needed + (4 << 20), 16 << 20), 48 << 20))

    partials = pl.pallas_call(
        kernel,
        out_shape=jax.ShapeDtypeStruct((G_r, 1, 1), jnp.float32),
        grid=(G_r, G_l),
        in_specs=[
            pl.BlockSpec((R, 1), lambda i, j: (i, 0)),
            pl.BlockSpec((R, LB), lambda i, j: (i, j)),
            pl.BlockSpec((R, LB), lambda i, j: (i, j)),
        ],
        out_specs=pl.BlockSpec((1, 1, 1), lambda i, j: (i, 0, 0)),
        compiler_params=pltpu.CompilerParams(
            dimension_semantics=("parallel", "arbitrary"),
            vmem_limit_bytes=vmem_limit),
        cost_estimate=pl.CostEstimate(
            flops=3 * total,
            transcendentals=0,
            bytes_accessed=2 * total * itemsize + NC_pad * 4 + G_r * 4),
        # TODO(synk): optionally pipeline_mode=pl.Buffered(3) on the two
        #             heatmap specs if profiling shows exposed DMA on v7x.
    )(w2, gt2, pred2)

    # Two-level reduce: per-row-block f32 partials in-kernel, tiny final sum
    # here.  1/total is computed exactly in Python float64 before the cast.
    return jnp.sum(partials) * jnp.float32(1.0 / float(total))


class HeatmapWeightedLoss:
    """JAX mirror of the PyTorch module (non-trainable per-class weights)."""

    def __init__(self, class_weights=(1.0, 1.0, 1.0), normalize_weights=False):
        w = jnp.asarray(class_weights, dtype=jnp.float32)[None, :]   # (1, C)
        if normalize_weights:
            w = w / jnp.sum(w)
        self.weights = w   # frozen parameter, shape (1, C)

    def __call__(self, heatmaps_gt, heatmaps_pred):
        return heatmap_weighted_loss(heatmaps_gt, heatmaps_pred, self.weights)


if __name__ == "__main__":
    key = jax.random.PRNGKey(0)
    k1, k2, k3, k4, k5, k6 = jax.random.split(key, 6)

    def ref_loss(gt, pred, w):
        c = w.shape[-1]
        wb = jnp.reshape(w, (1, c, 1, 1)).astype(jnp.float32)
        d = gt.astype(jnp.float32) - pred.astype(jnp.float32)
        return jnp.mean(wb * d * d)

    loss_fn = HeatmapWeightedLoss(class_weights=(1.0, 2.0, 0.5),
                                  normalize_weights=False)

    # 1) Main path: f32 NCHW heatmaps, single dense block.
    N, C, H, W = 2, 3, 16, 16
    gt = jax.random.uniform(k1, (N, C, H, W), dtype=jnp.float32)
    pred = jax.random.uniform(k2, (N, C, H, W), dtype=jnp.float32)
    out = jax.block_until_ready(loss_fn(gt, pred))
    ref = ref_loss(gt, pred, loss_fn.weights)
    assert jnp.allclose(out, ref, rtol=1e-5, atol=1e-6), (out, ref)

    # 2) bf16 streaming (half the HBM bytes; in-kernel upcast to f32).
    gt_bf, pred_bf = gt.astype(jnp.bfloat16), pred.astype(jnp.bfloat16)
    out_bf = jax.block_until_ready(loss_fn(gt_bf, pred_bf))
    ref_bf = ref_loss(gt_bf, pred_bf, loss_fn.weights)
    assert jnp.allclose(out_bf, ref_bf, rtol=1e-3, atol=1e-4), (out_bf, ref_bf)

    # 3) Ragged row axis: N*C = 9 -> R = 8, last row-block masked in-kernel.
    gt_r = jax.random.uniform(k3, (3, 3, 8, 12), dtype=jnp.float32)
    pred_r = jax.random.uniform(k4, (3, 3, 8, 12), dtype=jnp.float32)
    out_r = jax.block_until_ready(loss_fn(gt_r, pred_r))
    ref_r = ref_loss(gt_r, pred_r, loss_fn.weights)
    assert jnp.allclose(out_r, ref_r, rtol=1e-5, atol=1e-6), (out_r, ref_r)

    # 4) Ragged lane axis + multi-step lane grid (tiny budget override to
    #    exercise the large-heatmap split path with small test data).
    gt_l = jax.random.uniform(k5, (2, 3, 10, 18), dtype=jnp.float32)
    pred_l = jax.random.uniform(k6, (2, 3, 10, 18), dtype=jnp.float32)
    out_l = jax.block_until_ready(
        heatmap_weighted_loss(gt_l, pred_l, loss_fn.weights,
                              block_budget_bytes=4096))
    ref_l = ref_loss(gt_l, pred_l, loss_fn.weights)
    assert jnp.allclose(out_l, ref_l, rtol=1e-5, atol=1e-6), (out_l, ref_l)

    print("KERNEL_OK")
</pallas_src>

<mosaic_0001>
module attributes {stable_mosaic.version = 11 : i64} {
  func.func @_heatmap_weighted_loss_kernel(%arg0: i32, %arg1: i32, %arg2: memref<6x1xf32, #tpu.memory_space<vmem>>, %arg3: memref<6x256xf32, #tpu.memory_space<vmem>>, %arg4: memref<6x256xf32, #tpu.memory_space<vmem>>, %arg5: memref<1x1x1xf32, #tpu.memory_space<vmem>>) attributes {dimension_semantics = [#tpu.dimension_semantics<parallel>, #tpu.dimension_semantics<arbitrary>], iteration_bounds = array<i64: 1, 1>, scalar_prefetch = 0 : i64, scratch_operands = 0 : i64, tpu.core_type = #tpu.core_type<tc>, window_params = [{transform_indices = @transform_0, window_bounds = array<i64: 6, 1>}, {transform_indices = @transform_1, window_bounds = array<i64: 6, 256>}, {transform_indices = @transform_2, window_bounds = array<i64: 6, 256>}, {transform_indices = @transform_3, window_bounds = array<i64: 1, 1, 1>}]} {
    %c0 = arith.constant 0 : index
    %c0_0 = arith.constant 0 : index
    %0 = vector.load %arg3[%c0, %c0_0] : memref<6x256xf32, #tpu.memory_space<vmem>>, vector<6x256xf32>
    %c0_1 = arith.constant 0 : index
    %c0_2 = arith.constant 0 : index
    %1 = vector.load %arg4[%c0_1, %c0_2] : memref<6x256xf32, #tpu.memory_space<vmem>>, vector<6x256xf32>
    %2 = arith.subf %0, %1 : vector<6x256xf32>
    %3 = arith.mulf %2, %2 : vector<6x256xf32>
    %cst = arith.constant dense<0.000000e+00> : vector<6xf32>
    %4 = vector.multi_reduction <add>, %3, %cst [1] : vector<6x256xf32> to vector<6xf32>
    %5 = vector.shape_cast %4 : vector<6xf32> to vector<6x1xf32>
    %c0_3 = arith.constant 0 : index
    %c0_4 = arith.constant 0 : index
    %6 = vector.load %arg2[%c0_3, %c0_4] : memref<6x1xf32, #tpu.memory_space<vmem>>, vector<6x1xf32>
    %7 = arith.mulf %6, %5 : vector<6x1xf32>
    %8 = vector.shape_cast %7 : vector<6x1xf32> to vector<1x6x1xf32>
    %cst_5 = arith.constant dense<0.000000e+00> : vector<1xf32>
    %9 = vector.multi_reduction <add>, %8, %cst_5 [1, 2] : vector<1x6x1xf32> to vector<1xf32>
    %10 = vector.shape_cast %9 : vector<1xf32> to vector<1x1x1xf32>
    %11 = vector.extract %10[0, 0, 0] : f32 from vector<1x1x1xf32>
    %c0_i32 = arith.constant 0 : i32
    %12 = arith.cmpi eq, %arg1, %c0_i32 : i32
    %13 = arith.extui %12 : i1 to i32
    %c0_i32_6 = arith.constant 0 : i32
    %14 = arith.cmpi ne, %13, %c0_i32_6 : i32
    scf.if %14 {
      %cst_13 = arith.constant 0.000000e+00 : f32
      %19 = vector.broadcast %cst_13 : f32 to vector<1x1x1xf32>
      %c0_14 = arith.constant 0 : index
      %c0_15 = arith.constant 0 : index
      %c0_16 = arith.constant 0 : index
      %20 = vector.load %arg5[%c0_14, %c0_15, %c0_16] : memref<1x1x1xf32, #tpu.memory_space<vmem>>, vector<1x1x1xf32>
      tpu.vector_store %arg5[%c0_14, %c0_15, %c0_16], %19 {strides = array<i32>} : memref<1x1x1xf32, #tpu.memory_space<vmem>>, vector<1x1x1xf32>,
    } else {
    }
    %c0_7 = arith.constant 0 : index
    %c0_8 = arith.constant 0 : index
    %c0_9 = arith.constant 0 : index
    %15 = vector.load %arg5[%c0_7, %c0_8, %c0_9] : memref<1x1x1xf32, #tpu.memory_space<vmem>>, vector<1x1x1xf32>
    %16 = vector.broadcast %11 : f32 to vector<1x1x1xf32>
    %17 = arith.addf %15, %16 : vector<1x1x1xf32>
    %c0_10 = arith.constant 0 : index
    %c0_11 = arith.constant 0 : index
    %c0_12 = arith.constant 0 : index
    %18 = vector.load %arg5[%c0_10, %c0_11, %c0_12] : memref<1x1x1xf32, #tpu.memory_space<vmem>>, vector<1x1x1xf32>
    tpu.vector_store %arg5[%c0_10, %c0_11, %c0_12], %17 {strides = array<i32>} : memref<1x1x1xf32, #tpu.memory_space<vmem>>, vector<1x1x1xf32>,
    return
  }
  func.func @transform_0(%arg0: i32, %arg1: i32) -> (i32, i32) {
    %c0_i32 = arith.constant 0 : i32
    %c0_i32_0 = arith.constant 0 : i32
    return %arg0, %c0_i32 : i32, i32
  }
  func.func @transform_1(%arg0: i32, %arg1: i32) -> (i32, i32) {
    %c0_i32 = arith.constant 0 : i32
    return %arg0, %arg1 : i32, i32
  }
  func.func @transform_2(%arg0: i32, %arg1: i32) -> (i32, i32) {
    %c0_i32 = arith.constant 0 : i32
    return %arg0, %arg1 : i32, i32
  }
  func.func @transform_3(%arg0: i32, %arg1: i32) -> (i32, i32, i32) {
    %c0_i32 = arith.constant 0 : i32
    %c0_i32_0 = arith.constant 0 : i32
    %c0_i32_1 = arith.constant 0 : i32
    return %arg0, %c0_i32, %c0_i32_0 : i32, i32, i32
  }
}

</mosaic_0001>

<llo_original>
// kernel: tpu_custom_call.1
$region0: #{tpu_custom_call.1}
  #allocation0 [shape = 'u32[]', space=smem, size = 0x4, offset = 0x4, fixed_abs, tag = 'smem constant byte address 0x4 - core index']
  #allocation1 [shape = 'u32[144,128]{1,0:T(1,128)}', space=vmem, size = 0x12000, scoped, tag = 'internal scratch']
  %s0 = inlined_call_operand.vmem [shape: f32[6,1], index: 0, kind: input, shape index: {}]
  %s1 = inlined_call_operand.hbm [shape: f32[6,256], index: 1, kind: input, shape index: {}]
  %s2 = inlined_call_operand.hbm [shape: f32[6,256], index: 2, kind: input, shape index: {}]
  %s3 = inlined_call_operand.hbm [shape: f32[1,1,1], index: 3, kind: output, shape index: {}]
  %s4 = sld [smem:[#allocation0]]
  $region34: #{tpu_custom_call.1} parent=0
    _
  %s6 = ssub.s32 1, %s4
  %s7 = scalar_select 0, %s6, %s4
  $region1: #{tpu_custom_call.1} parent=0
    #allocation2 [shape = 'u8[8192]{0}', space=vmem, size = 0x2000, scoped, tag = 'input window, operand 1, single buffered']
    #allocation3 [shape = 's32[1]{0}', space=sflag, size = 0x4, scoped, tag = 'scoped memory for tpu_custom_call.1']
    #allocation4 [shape = 's32[1]{0}', space=sflag, size = 0x4, scoped, tag = 'scoped memory for tpu_custom_call.1']
    #allocation5 [shape = 'u8[8192]{0}', space=vmem, size = 0x2000, scoped, tag = 'input window, operand 2, single buffered']
    #allocation6 [shape = 's32[1]{0}', space=sflag, size = 0x4, scoped, tag = 'scoped memory for tpu_custom_call.1']
    #allocation7 [shape = 'u8[512]{0}', space=vmem, size = 0x400, scoped, tag = 'output window, operand 0, single buffered']
    %8 = vsyncpa [#allocation3], 0
    %9 = vsyncpa [#allocation6], 0
    %10 = vsyncpa [#allocation4], 0
    // Predicated region
    $region2: #{tpu_custom_call.1} parent=1 // pred_check
      _
    $region3: #{tpu_custom_call.1} parent=1 // pred_check_branch
      %12 = sbr.rel (0) target = $region5
    $region4: #{tpu_custom_call.1} parent=1 // pred_region
      _
    $region5: #{tpu_custom_call.1} parent=1 // pred_fallthru
      _
    // Predicated region
    $region6: #{tpu_custom_call.1} parent=1 // pred_check
      _
    $region7: #{tpu_custom_call.1} parent=1 // pred_check_branch
      %14 = sbr.rel (0) target = $region9
    $region8: #{tpu_custom_call.1} parent=1 // pred_region
      %s16 = ssub.s32 256, 256
      %17 = vsyncadd [#allocation3], %s16
      %s19 = sshll.u32 [#allocation2], 4
      %s20 = int_to_ptr.vmem [resolvable:$true] %s19
      %22 = dma.hbm_to_vmem [thread:$0]  %s1, 256, %s20, [#allocation3]
    $region9: #{tpu_custom_call.1} parent=1 // pred_fallthru
      _
    // Predicated region
    $region10: #{tpu_custom_call.1} parent=1 // pred_check
      _
    $region11: #{tpu_custom_call.1} parent=1 // pred_check_branch
      %24 = sbr.rel (0) target = $region13
    $region12: #{tpu_custom_call.1} parent=1 // pred_region
      %s26 = ssub.s32 256, 256
      %27 = vsyncadd [#allocation6], %s26
      %s29 = sshll.u32 [#allocation5], 4
      %s30 = int_to_ptr.vmem [resolvable:$true] %s29
      %32 = dma.hbm_to_vmem [thread:$0]  %s2, 256, %s30, [#allocation6]
    $region13: #{tpu_custom_call.1} parent=1 // pred_fallthru
      _
    // Predicated region
    $region14: #{tpu_custom_call.1} parent=1 // pred_check
      _
    $region15: #{tpu_custom_call.1} parent=1 // pred_check_branch
      %34 = sbr.rel (0) target = $region17
    $region16: #{tpu_custom_call.1} parent=1 // pred_region
      %35 = dma.done [#allocation3], 256
    $region17: #{tpu_custom_call.1} parent=1 // pred_fallthru
      _
    // Predicated region
    $region18: #{tpu_custom_call.1} parent=1 // pred_check
      _
    $region19: #{tpu_custom_call.1} parent=1 // pred_check_branch
      %37 = sbr.rel (0) target = $region21
    $region20: #{tpu_custom_call.1} parent=1 // pred_region
      %38 = dma.done [#allocation6], 256
    $region21: #{tpu_custom_call.1} parent=1 // pred_fallthru
      _
    %v39 = vld [vmem:[#allocation2] sm:$0x3f]
    %v40 = vld [vmem:[#allocation2 + $0x8] sm:$0x3f]
    %v41 = vld [vmem:[#allocation5] sm:$0x3f]
    %v42 = vld [vmem:[#allocation5 + $0x8] sm:$0x3f]
    %v43 = vsub.f32 %v39, %v41
    %v44 = vsub.f32 %v40, %v42
    %v45 = vmul.f32 %v43, %v43
    %v46 = vmul.f32 %v44, %v44
    %vm47 = vcmask 1045504
    %v48 = vsel %vm47, %v45, 0.0
    %v49 = vsel %vm47, %v46, 0.0
    %v50 = vadd.f32 %v48, %v49
    %51 = vadd.xlane.f32.xlu0 %v50
    %v52 = vpop.xlane.xlu0 %51
    %v53 = vld [vmem:[%s0] sm:$0x3f]
    %v54 = vmul.f32 %v53, %v52
    %vm55 = vcmask 5120
    %v56 = vsel %vm55, %v54, 0.0
    %57 = vadd.xlane.f32.xlu0 %v56
    %v58 = vpop.xlane.xlu0 %57
    %v59 = vrot.slane %v58, 4
    %v60 = vadd.f32 %v58, %v59
    %v61 = vrot.slane %v60, 2
    %v62 = vadd.f32 %v60, %v61
    %v63 = vrot.slane %v62, 1
    %v64 = vadd.f32 %v62, %v63
    %s65 = vtos %v64
    %p66 = scmp.eq.s32.totalorder 0, 0
    // Predicated region
    $region22: #{tpu_custom_call.1} parent=1 // pred_check
      %p67 = pneg %p66
    $region23: #{tpu_custom_call.1} parent=1 // pred_check_branch
      %69 = sbr.rel (%p67) target = $region25
    $region24: #{tpu_custom_call.1} parent=1 // pred_region
      %vm70 = vcmask 0
      %71 = vst.msk [vmem:[#allocation7] sm:$0x1] %vm70, 0.0
    $region25: #{tpu_custom_call.1} parent=1 // pred_fallthru
      _
    %v72 = vld [vmem:[#allocation7] sm:$0x1]
    %v73 = vstv %s65
    %v74 = vadd.f32 %v72, %v73
    %vm75 = vcmask 0
    %76 = vst.msk [vmem:[#allocation7] sm:$0x1] %vm75, %v74
    // Predicated region
    $region26: #{tpu_custom_call.1} parent=1 // pred_check
      _
    $region27: #{tpu_custom_call.1} parent=1 // pred_check_branch
      %78 = sbr.rel (0) target = $region29
    $region28: #{tpu_custom_call.1} parent=1 // pred_region
      %s80 = ssub.s32 16, 16
      %81 = vsyncadd [#allocation4], %s80
      %s83 = sshll.u32 [#allocation7], 4
      %s84 = int_to_ptr.vmem [resolvable:$true] %s83
      %86 = dma.vmem_to_hbm [thread:$0]  %s84, 16, %s3, [#allocation4]
    $region29: #{tpu_custom_call.1} parent=1 // pred_fallthru
      _
    // Predicated region
    $region30: #{tpu_custom_call.1} parent=1 // pred_check
      _
    $region31: #{tpu_custom_call.1} parent=1 // pred_check_branch
      %88 = sbr.rel (0) target = $region33
    $region32: #{tpu_custom_call.1} parent=1 // pred_region
      %89 = dma.done [#allocation4], 16
    $region33: #{tpu_custom_call.1} parent=1 // pred_fallthru
      _
    %90 = vsyncpa [#allocation3], 1
    %91 = vsyncpa [#allocation6], 1
    %92 = vsyncpa [#allocation4], 1

</llo_original>
